<compile_context>
chip_gen: v7x
topology: tpu7x:2x2x1
jax: 0.10.0
libtpu: 0.0.40
codegen_flags: <defaults>
</compile_context>

<pallas_src>
import numpy as np
import jax
import jax.numpy as jnp
from jax.experimental import pallas as pl
from jax.experimental.pallas import tpu as pltpu

B, C1, A = 2, 16, 256           # batch, DFL bins, anchors  (input channels c = 4*C1 = 64)
C = 4 * C1


# ---------------- Pallas kernel ----------------
def dfl_kernel(x_ref, w_ref, o_ref):
    x = x_ref[0]                                  # (4, C1, A)  logits, f32
    w = w_ref[...]                                # (C1, 1)     frozen conv weight (= arange)

    # numerically stable softmax over the bin axis, fused with the weighted sum
    m = jnp.max(x, axis=1, keepdims=True)         # (4, 1, A)   XLU sublane reduce
    e = jnp.exp(x - m)                            # (4, C1, A)  EUP
    den = jnp.sum(e, axis=1)                      # (4, A)      XLU
    num = jnp.sum(e * w[None, :, :], axis=1)      # (4, A)      VPU mul + XLU reduce

    inv = pl.reciprocal(den, approx=True)         # EUP approximate reciprocal
    inv = inv * (2.0 - den * inv)                 # one Newton step -> ~f32 accuracy, still no divide
    o_ref[0] = num * inv                          # (4, A) lane-dense store


# ---------------- wrapper ----------------
def dfl(x, w):
    """x: (B, 4*c1, A) float32 logits;  w: (c1,) float32 frozen conv weight."""
    b, c, a = x.shape
    c1 = w.shape[0]
    assert c == 4 * c1

    # keep the anchor (lane) axis a multiple of 128 for lane-dense vregs / unmasked stores
    a_pad = -a % 128
    xp = jnp.pad(x, ((0, 0), (0, 0), (0, a_pad))) if a_pad else x
    ap = a + a_pad

    xg = xp.reshape(b, 4, c1, ap)                 # == torch .view(b, 4, c1, a)
    wk = w.reshape(c1, 1)

    out = pl.pallas_call(
        dfl_kernel,
        out_shape=jax.ShapeDtypeStruct((b, 4, ap), x.dtype),
        grid_spec=pltpu.PrefetchScalarGridSpec(
            num_scalar_prefetch=0,
            grid=(b,),                            # v7x: 2 TCs split the batch; v5e/v6e: cheap loop
            in_specs=[
                pl.BlockSpec((1, 4, c1, ap), lambda n: (n, 0, 0, 0)),
                pl.BlockSpec((c1, 1), lambda n: (0, 0)),
            ],
            out_specs=pl.BlockSpec((1, 4, ap), lambda n: (n, 0, 0)),
        ),
        compiler_params=pltpu.CompilerParams(dimension_semantics=("parallel",)),
    )(xg, wk)
    return out[:, :, :a]


# ---------------- pure-JAX reference (mirrors the PyTorch forward) ----------------
def reference(x, w, c1):
    b, c, a = x.shape
    y = jnp.transpose(x.reshape(b, 4, c1, a), (0, 2, 1, 3))   # (b, c1, 4, a)
    p = jax.nn.softmax(y, axis=1)                             # softmax over bins
    return jnp.einsum('bcga,c->bga', p, w)                    # 1x1 conv with arange weight


if __name__ == "__main__":
    key = jax.random.PRNGKey(0)
    x = jax.random.normal(key, (B, C, A), jnp.float32) * 2.0
    w = jnp.arange(C1, dtype=jnp.float32)          # DFL conv weight: arange(c1), frozen

    out = jax.block_until_ready(dfl(x, w))
    ref = reference(x, w, C1)

    np.testing.assert_allclose(np.asarray(out), np.asarray(ref), rtol=2e-4, atol=2e-4)
    print("KERNEL_OK")
</pallas_src>

<mosaic_0001>
module attributes {stable_mosaic.version = 11 : i64} {
  func.func @dfl_kernel(%arg0: i32, %arg1: memref<1x4x16x256xf32, #tpu.memory_space<vmem>>, %arg2: memref<16x1xf32, #tpu.memory_space<vmem>>, %arg3: memref<1x4x256xf32, #tpu.memory_space<vmem>>) attributes {dimension_semantics = [#tpu.dimension_semantics<parallel>], iteration_bounds = array<i64: 2>, scalar_prefetch = 0 : i64, scratch_operands = 0 : i64, tpu.core_type = #tpu.core_type<tc>, window_params = [{transform_indices = @transform_0, window_bounds = array<i64: 1, 4, 16, 256>}, {pipeline_mode = #tpu.pipeline_mode<synchronous>, transform_indices = @transform_1, window_bounds = array<i64: 16, 1>}, {transform_indices = @transform_2, window_bounds = array<i64: 1, 4, 256>}]} {
    %c0 = arith.constant 0 : index
    %c0_0 = arith.constant 0 : index
    %c0_1 = arith.constant 0 : index
    %c0_2 = arith.constant 0 : index
    %0 = vector.load %arg1[%c0, %c0_0, %c0_1, %c0_2] : memref<1x4x16x256xf32, #tpu.memory_space<vmem>>, vector<1x4x16x256xf32>
    %1 = vector.shape_cast %0 : vector<1x4x16x256xf32> to vector<4x16x256xf32>
    %c0_3 = arith.constant 0 : index
    %c0_4 = arith.constant 0 : index
    %2 = vector.load %arg2[%c0_3, %c0_4] : memref<16x1xf32, #tpu.memory_space<vmem>>, vector<16x1xf32>
    %cst = arith.constant dense<0xFF800000> : vector<4x256xf32>
    %3 = vector.multi_reduction <maximumf>, %1, %cst [1] : vector<4x16x256xf32> to vector<4x256xf32>
    %4 = vector.shape_cast %3 : vector<4x256xf32> to vector<4x1x256xf32>
    %5 = vector.broadcast %4 : vector<4x1x256xf32> to vector<4x16x256xf32>
    %6 = arith.subf %1, %5 : vector<4x16x256xf32>
    %7 = math.exp %6 : vector<4x16x256xf32>
    %cst_5 = arith.constant dense<0.000000e+00> : vector<4x256xf32>
    %8 = vector.multi_reduction <add>, %7, %cst_5 [1] : vector<4x16x256xf32> to vector<4x256xf32>
    %9 = vector.shape_cast %2 : vector<16x1xf32> to vector<1x16x1xf32>
    %10 = vector.broadcast %9 : vector<1x16x1xf32> to vector<4x16x256xf32>
    %11 = arith.mulf %7, %10 : vector<4x16x256xf32>
    %cst_6 = arith.constant dense<0.000000e+00> : vector<4x256xf32>
    %12 = vector.multi_reduction <add>, %11, %cst_6 [1] : vector<4x16x256xf32> to vector<4x256xf32>
    %13 = tpu.reciprocal %8 {approx = true} : vector<4x256xf32> -> vector<4x256xf32>
    %14 = arith.mulf %8, %13 : vector<4x256xf32>
    %cst_7 = arith.constant 2.000000e+00 : f32
    %15 = vector.broadcast %cst_7 : f32 to vector<4x256xf32>
    %16 = arith.subf %15, %14 : vector<4x256xf32>
    %17 = arith.mulf %13, %16 : vector<4x256xf32>
    %18 = arith.mulf %12, %17 : vector<4x256xf32>
    %c0_8 = arith.constant 0 : index
    %c0_9 = arith.constant 0 : index
    %c0_10 = arith.constant 0 : index
    %19 = vector.load %arg3[%c0_8, %c0_9, %c0_10] : memref<1x4x256xf32, #tpu.memory_space<vmem>>, vector<1x4x256xf32>
    %20 = vector.shape_cast %19 : vector<1x4x256xf32> to vector<4x256xf32>
    %21 = vector.shape_cast %18 : vector<4x256xf32> to vector<1x4x256xf32>
    tpu.vector_store %arg3[%c0_8, %c0_9, %c0_10], %21 {strides = array<i32>} : memref<1x4x256xf32, #tpu.memory_space<vmem>>, vector<1x4x256xf32>,
    return
  }
  func.func @transform_0(%arg0: i32) -> (i32, i32, i32, i32) {
    %c0_i32 = arith.constant 0 : i32
    %c0_i32_0 = arith.constant 0 : i32
    %c0_i32_1 = arith.constant 0 : i32
    %c0_i32_2 = arith.constant 0 : i32
    return %arg0, %c0_i32, %c0_i32_0, %c0_i32_1 : i32, i32, i32, i32
  }
  func.func @transform_1(%arg0: i32) -> (i32, i32) {
    %c0_i32 = arith.constant 0 : i32
    %c0_i32_0 = arith.constant 0 : i32
    %c0_i32_1 = arith.constant 0 : i32
    return %c0_i32, %c0_i32_0 : i32, i32
  }
  func.func @transform_2(%arg0: i32) -> (i32, i32, i32) {
    %c0_i32 = arith.constant 0 : i32
    %c0_i32_0 = arith.constant 0 : i32
    %c0_i32_1 = arith.constant 0 : i32
    return %arg0, %c0_i32, %c0_i32_0 : i32, i32, i32
  }
}

</mosaic_0001>

<llo_original>
// kernel: tpu_custom_call.1
$region0: #{tpu_custom_call.1}
  #allocation0 [shape = 'u32[]', space=smem, size = 0x4, offset = 0x4, fixed_abs, tag = 'smem constant byte address 0x4 - core index']
  #allocation1 [shape = 'u32[144,128]{1,0:T(1,128)}', space=vmem, size = 0x12000, scoped, tag = 'internal scratch']
  %s0 = inlined_call_operand.hbm [shape: f32[2,4,16,256], index: 0, kind: input, shape index: {}]
  %s1 = inlined_call_operand.vmem [shape: f32[16,1], index: 1, kind: input, shape index: {}]
  %s2 = inlined_call_operand.hbm [shape: f32[2,4,256], index: 2, kind: output, shape index: {}]
  %s3 = sld [smem:[#allocation0]]
  $region45: #{tpu_custom_call.1} parent=0
    _
  %s5 = ssub.s32 1, %s3
  %s6 = scalar_select 0, %s5, %s3
  $region1: #{tpu_custom_call.1} parent=0
    #allocation2 [shape = 'u8[131072]{0}', space=vmem, size = 0x20000, scoped, tag = 'input window, operand 0']
    #allocation3 [shape = 's32[2]{0}', space=sflag, size = 0x8, scoped, tag = 'scoped memory for tpu_custom_call.1']
    #allocation4 [shape = 's32[2]{0}', space=sflag, size = 0x8, scoped, tag = 'scoped memory for tpu_custom_call.1']
    #allocation5 [shape = 'u8[8192]{0}', space=vmem, size = 0x2000, scoped, tag = 'output window, operand 0']
    %7 = vsyncpa [#allocation3], 0
    %s8 = scalar_lea.sflag [#allocation3], 1
    %9 = vsyncpa %s8, 0
    %10 = vsyncpa [#allocation4], 0
    %s11 = scalar_lea.sflag [#allocation4], 1
    %12 = vsyncpa %s11, 0
    loop: start=0, step=1, limit=4
    $region2: #{tpu_custom_call.1} parent=1 // loop_pre_header
      _
    $region3: #{tpu_custom_call.1} parent=1 // loop_header
      %s14 = sphi 0, %s18
      %p15 = scmp.ge.s32.totalorder %s14, 4
      %s24 = sphi 0, %s26
      %s27 = sphi 0, %s24
      %s28 = sphi 0, %s27
      %s44 = sphi 0, %s28
      %s48 = sphi 0, %s48
      %s50 = sphi 0, %s48
      %s51 = sphi 0, %s50
      %s65 = sphi 0, %s51
      %s71 = sphi 0, %s73
      %s74 = sphi 0, %s71
      %s75 = sphi 0, %s74
      %s91 = sphi 0, %s75
    $region4: #{tpu_custom_call.1} parent=1 // loop_header_branch
      %17 = sbr.rel (%p15) target = $region8
    $region5: #{tpu_custom_call.1} parent=1 // loop_body
      %s19 = ssub.s32 %s14, 1
      %s20 = ssub.s32 %s14, 2
      %s21 = sadd.s32 %s14, 1
      %s22 = ssub.s32 %s14, %s21
      %p23 = scmp.eq.s32.totalorder %s22, 0
      %s25 = sadd.s32 %s24, 1
      %s26 = scalar_select %p23, %s24, %s25
      %p29 = pneg %p23
      %p30 = scmp.eq.s32.totalorder %s14, 1
      %p31 = por %p29, %p30
      %p32 = scmp.ne.s32.totalorder %s24, %s27
      %p33 = scmp.eq.s32.totalorder %s14, 0
      %p34 = por %p32, %p33
      %p35 = scmp.ne.s32.totalorder %s24, %s27
      %p36 = scmp.eq.s32.totalorder %s19, 1
      %p37 = por %p35, %p36
      %p38 = scmp.ne.s32.totalorder %s27, %s28
      %p39 = scmp.eq.s32.totalorder %s19, 0
      %p40 = por %p38, %p39
      %p41 = scmp.ne.s32.totalorder %s27, %s28
      %p42 = scmp.eq.s32.totalorder %s20, 1
      %p43 = por %p41, %p42
      %p45 = scmp.ne.s32.totalorder %s28, %s44
      %p46 = scmp.eq.s32.totalorder %s20, 0
      %p47 = por %p45, %p46
      %s49 = sadd.s32 %s48, 1
      %p52 = scmp.eq.s32.totalorder %s14, 1
      %p53 = scmp.ne.s32.totalorder %s48, %s50
      %p54 = scmp.eq.s32.totalorder %s14, 0
      %p55 = por %p53, %p54
      %p56 = scmp.ne.s32.totalorder %s48, %s50
      %p57 = scmp.eq.s32.totalorder %s19, 1
      %p58 = por %p56, %p57
      %p59 = scmp.ne.s32.totalorder %s50, %s51
      %p60 = scmp.eq.s32.totalorder %s19, 0
      %p61 = por %p59, %p60
      %p62 = scmp.ne.s32.totalorder %s50, %s51
      %p63 = scmp.eq.s32.totalorder %s20, 1
      %p64 = por %p62, %p63
      %p66 = scmp.ne.s32.totalorder %s51, %s65
      %p67 = scmp.eq.s32.totalorder %s20, 0
      %p68 = por %p66, %p67
      %s69 = ssub.s32 %s14, %s21
      %p70 = scmp.eq.s32.totalorder %s69, 0
      %s72 = sadd.s32 %s71, 1
      %s73 = scalar_select %p70, %s71, %s72
      %p76 = pneg %p70
      %p77 = scmp.eq.s32.totalorder %s14, 1
      %p78 = por %p76, %p77
      %p79 = scmp.ne.s32.totalorder %s71, %s74
      %p80 = scmp.eq.s32.totalorder %s14, 0
      %p81 = por %p79, %p80
      %p82 = scmp.ne.s32.totalorder %s71, %s74
      %p83 = scmp.eq.s32.totalorder %s19, 1
      %p84 = por %p82, %p83
      %p85 = scmp.ne.s32.totalorder %s74, %s75
      %p86 = scmp.eq.s32.totalorder %s19, 0
      %p87 = por %p85, %p86
      %p88 = scmp.ne.s32.totalorder %s74, %s75
      %p89 = scmp.eq.s32.totalorder %s20, 1
      %p90 = por %p88, %p89
      %p92 = scmp.ne.s32.totalorder %s75, %s91
      %p93 = scmp.eq.s32.totalorder %s20, 0
      %p94 = por %p92, %p93
      %p95 = scmp.le.s32.totalorder 1, %s14
      %p96 = scmp.lt.s32.totalorder %s14, 3
      %p97 = pnand %p95, %p96
      %p98 = pneg %p97
      // Predicated region
      $region9: #{tpu_custom_call.1} parent=5 // pred_check
        _
      $region10: #{tpu_custom_call.1} parent=5 // pred_check_branch
        %100 = sbr.rel (%p97) target = $region12
      $region11: #{tpu_custom_call.1} parent=5 // pred_region
        %s101 = ssub.s32 %s14, 1
        // Predicated region
        $region13: #{tpu_custom_call.1} parent=11 // pred_check
          %p102 = pneg %p61
        $region14: #{tpu_custom_call.1} parent=11 // pred_check_branch
          %104 = sbr.rel (%p102) target = $region16
        $region15: #{tpu_custom_call.1} parent=11 // pred_region
          _
        $region16: #{tpu_custom_call.1} parent=11 // pred_fallthru
          _
      $region12: #{tpu_custom_call.1} parent=5 // pred_fallthru
        _
      %p105 = scmp.lt.s32.totalorder %s14, 2
      // Predicated region
      $region17: #{tpu_custom_call.1} parent=5 // pred_check
        %p106 = pneg %p105
      $region18: #{tpu_custom_call.1} parent=5 // pred_check_branch
        %108 = sbr.rel (%p106) target = $region20
      $region19: #{tpu_custom_call.1} parent=5 // pred_region
        // Predicated region
        $region21: #{tpu_custom_call.1} parent=19 // pred_check
          %p109 = pneg %p34
        $region22: #{tpu_custom_call.1} parent=19 // pred_check_branch
          %111 = sbr.rel (%p109) target = $region24
        $region23: #{tpu_custom_call.1} parent=19 // pred_region
          %s112 = sand.u32 %s24, 1
          %s113 = scalar_lea.sflag [#allocation3], %s112
          %s114 = sand.u32 %s24, 1
          %s115 = smul.addr %s114, 128
          %s116 = scalar_lea.vmem [#allocation2], %s115
          %s118 = ssub.s32 2048, 2048
          %119 = vsyncadd %s113, %s118
          %s120 = smul.addr %s14, 16
          %s121 = smul.addr %s120, 128
          %s122 = scalar_lea.hbm %s0, %s121
          %s123 = sshll.u32 %s116, 4
          %s124 = int_to_ptr.vmem [resolvable:$true] %s123
          %129 = dma.hbm_to_vmem [thread:$0]  %s122, 2048, %s124, %s113, 256, 256, 16
        $region24: #{tpu_custom_call.1} parent=19 // pred_fallthru
          _
      $region20: #{tpu_custom_call.1} parent=5 // pred_fallthru
        _
      %p130 = scmp.le.s32.totalorder 1, %s14
      %p131 = scmp.lt.s32.totalorder %s14, 3
      %p132 = pnand %p130, %p131
      %p133 = pneg %p132
      // Predicated region
      $region25: #{tpu_custom_call.1} parent=5 // pred_check
        _
      $region26: #{tpu_custom_call.1} parent=5 // pred_check_branch
        %135 = sbr.rel (%p132) target = $region28
      $region27: #{tpu_custom_call.1} parent=5 // pred_region
        %s136 = ssub.s32 %s14, 1
        %s137 = sand.u32 %s27, 1
        %s138 = scalar_lea.sflag [#allocation3], %s137
        %s139 = sand.u32 %s27, 1
        %s140 = smul.addr %s139, 128
        %s141 = scalar_lea.vmem [#allocation2], %s140
        // Predicated region
        $region29: #{tpu_custom_call.1} parent=27 // pred_check
          %p142 = pneg %p40
        $region30: #{tpu_custom_call.1} parent=27 // pred_check_branch
          %144 = sbr.rel (%p142) target = $region32
        $region31: #{tpu_custom_call.1} parent=27 // pred_region
          %145 = dma.done %s138, 2048
        $region32: #{tpu_custom_call.1} parent=27 // pred_fallthru
          _
        %s146 = sand.u32 %s27, 1
        %s147 = scalar_lea.sflag [#allocation3], %s146
        %s148 = sand.u32 %s27, 1
        %s149 = smul.addr %s148, 128
        %s150 = scalar_lea.vmem [#allocation2], %s149
        %p151 = pneg %p40
        %p152 = pneg %p37
        %p153 = pneg %p61
        %p154 = pneg %p58
        %p155 = pneg %p87
        %p156 = pneg %p84
        %s157 = sand.u32 %s74, 1
        %s158 = scalar_lea.sflag [#allocation4], %s157
        %s159 = sand.u32 %s74, 1
        %s160 = smul.addr %s159, 8
        %s161 = scalar_lea.vmem [#allocation5], %s160
        %v162 = vld [vmem:[%s141] sm:$0xff]
        %v163 = vld [vmem:[%s141 + $0x8] sm:$0xff]
        %v164 = vld [vmem:[%s141 + $0x10] sm:$0xff]
        %v165 = vld [vmem:[%s141 + $0x18] sm:$0xff]
        %v166 = vld [vmem:[%s141 + $0x20] sm:$0xff]
        %v167 = vld [vmem:[%s141 + $0x28] sm:$0xff]
        %v168 = vld [vmem:[%s141 + $0x30] sm:$0xff]
        %v169 = vld [vmem:[%s141 + $0x38] sm:$0xff]
        %v170 = vld [vmem:[%s141 + $0x40] sm:$0xff]
        %v171 = vld [vmem:[%s141 + $0x48] sm:$0xff]
        %v172 = vld [vmem:[%s141 + $0x50] sm:$0xff]
        %v173 = vld [vmem:[%s141 + $0x58] sm:$0xff]
        %v174 = vld [vmem:[%s141 + $0x60] sm:$0xff]
        %v175 = vld [vmem:[%s141 + $0x68] sm:$0xff]
        %v176 = vld [vmem:[%s141 + $0x70] sm:$0xff]
        %v177 = vld [vmem:[%s141 + $0x78] sm:$0xff]
        %v178 = vld [vmem:[%s1] sm:$0xff]
        %v179 = vld [vmem:[%s1 + $0x8] sm:$0xff]
        %v180 = vmax.f32 %v162, %v164
        %v181 = vrot.slane %v180, 4
        %v182 = vmax.f32 %v180, %v181
        %v183 = vrot.slane %v182, 2
        %v184 = vmax.f32 %v182, %v183
        %v185 = vrot.slane %v184, 1
        %v186 = vmax.f32 %v184, %v185
        %v187 = vmax.f32 %v163, %v165
        %v188 = vrot.slane %v187, 4
        %v189 = vmax.f32 %v187, %v188
        %v190 = vrot.slane %v189, 2
        %v191 = vmax.f32 %v189, %v190
        %v192 = vrot.slane %v191, 1
        %v193 = vmax.f32 %v191, %v192
        %v194 = vmax.f32 %v166, %v168
        %v195 = vrot.slane %v194, 4
        %v196 = vmax.f32 %v194, %v195
        %v197 = vrot.slane %v196, 2
        %v198 = vmax.f32 %v196, %v197
        %v199 = vrot.slane %v198, 1
        %v200 = vmax.f32 %v198, %v199
        %v201 = vmax.f32 %v167, %v169
        %v202 = vrot.slane %v201, 4
        %v203 = vmax.f32 %v201, %v202
        %v204 = vrot.slane %v203, 2
        %v205 = vmax.f32 %v203, %v204
        %v206 = vrot.slane %v205, 1
        %v207 = vmax.f32 %v205, %v206
        %v208 = vmax.f32 %v170, %v172
        %v209 = vrot.slane %v208, 4
        %v210 = vmax.f32 %v208, %v209
        %v211 = vrot.slane %v210, 2
        %v212 = vmax.f32 %v210, %v211
        %v213 = vrot.slane %v212, 1
        %v214 = vmax.f32 %v212, %v213
        %v215 = vmax.f32 %v171, %v173
        %v216 = vrot.slane %v215, 4
        %v217 = vmax.f32 %v215, %v216
        %v218 = vrot.slane %v217, 2
        %v219 = vmax.f32 %v217, %v218
        %v220 = vrot.slane %v219, 1
        %v221 = vmax.f32 %v219, %v220
        %v222 = vmax.f32 %v174, %v176
        %v223 = vrot.slane %v222, 4
        %v224 = vmax.f32 %v222, %v223
        %v225 = vrot.slane %v224, 2
        %v226 = vmax.f32 %v224, %v225
        %v227 = vrot.slane %v226, 1
        %v228 = vmax.f32 %v226, %v227
        %v229 = vmax.f32 %v175, %v177
        %v230 = vrot.slane %v229, 4
        %v231 = vmax.f32 %v229, %v230
        %v232 = vrot.slane %v231, 2
        %v233 = vmax.f32 %v231, %v232
        %v234 = vrot.slane %v233, 1
        %v235 = vmax.f32 %v233, %v234
        %v236 = vsub.f32 %v162, %v186
        %v237 = vsub.f32 %v163, %v193
        %v238 = vsub.f32 %v164, %v186
        %v239 = vsub.f32 %v165, %v193
        %v240 = vsub.f32 %v166, %v200
        %v241 = vsub.f32 %v167, %v207
        %v242 = vsub.f32 %v168, %v200
        %v243 = vsub.f32 %v169, %v207
        %v244 = vsub.f32 %v170, %v214
        %v245 = vsub.f32 %v171, %v221
        %v246 = vsub.f32 %v172, %v214
        %v247 = vsub.f32 %v173, %v221
        %v248 = vsub.f32 %v174, %v228
        %v249 = vsub.f32 %v175, %v235
        %v250 = vsub.f32 %v176, %v228
        %v251 = vsub.f32 %v177, %v235
        %v252 = vmul.f32 %v236, 1.442695
        %v253 = vpow.pop %v252
        %v254 = vmul.f32 %v237, 1.442695
        %v255 = vpow.pop %v254
        %v256 = vmul.f32 %v238, 1.442695
        %v257 = vpow.pop %v256
        %v258 = vmul.f32 %v239, 1.442695
        %v259 = vpow.pop %v258
        %v260 = vmul.f32 %v240, 1.442695
        %v261 = vpow.pop %v260
        %v262 = vmul.f32 %v241, 1.442695
        %v263 = vpow.pop %v262
        %v264 = vmul.f32 %v242, 1.442695
        %v265 = vpow.pop %v264
        %v266 = vmul.f32 %v243, 1.442695
        %v267 = vpow.pop %v266
        %v268 = vmul.f32 %v244, 1.442695
        %v269 = vpow.pop %v268
        %v270 = vmul.f32 %v245, 1.442695
        %v271 = vpow.pop %v270
        %v272 = vmul.f32 %v246, 1.442695
        %v273 = vpow.pop %v272
        %v274 = vmul.f32 %v247, 1.442695
        %v275 = vpow.pop %v274
        %v276 = vmul.f32 %v248, 1.442695
        %v277 = vpow.pop %v276
        %v278 = vmul.f32 %v249, 1.442695
        %v279 = vpow.pop %v278
        %v280 = vmul.f32 %v250, 1.442695
        %v281 = vpow.pop %v280
        %v282 = vmul.f32 %v251, 1.442695
        %v283 = vpow.pop %v282
        %v284 = vadd.f32 %v253, %v257
        %v285 = vrot.slane %v284, 4
        %v286 = vadd.f32 %v284, %v285
        %v287 = vrot.slane %v286, 2
        %v288 = vadd.f32 %v286, %v287
        %v289 = vrot.slane %v288, 1
        %v290 = vadd.f32 %v288, %v289
        %v291 = vadd.f32 %v255, %v259
        %v292 = vrot.slane %v291, 4
        %v293 = vadd.f32 %v291, %v292
        %v294 = vrot.slane %v293, 2
        %v295 = vadd.f32 %v293, %v294
        %v296 = vrot.slane %v295, 1
        %v297 = vadd.f32 %v295, %v296
        %v298 = vadd.f32 %v261, %v265
        %v299 = vrot.slane %v298, 4
        %v300 = vadd.f32 %v298, %v299
        %v301 = vrot.slane %v300, 2
        %v302 = vadd.f32 %v300, %v301
        %v303 = vrot.slane %v302, 1
        %v304 = vadd.f32 %v302, %v303
        %v305 = vadd.f32 %v263, %v267
        %v306 = vrot.slane %v305, 4
        %v307 = vadd.f32 %v305, %v306
        %v308 = vrot.slane %v307, 2
        %v309 = vadd.f32 %v307, %v308
        %v310 = vrot.slane %v309, 1
        %v311 = vadd.f32 %v309, %v310
        %v312 = vadd.f32 %v269, %v273
        %v313 = vrot.slane %v312, 4
        %v314 = vadd.f32 %v312, %v313
        %v315 = vrot.slane %v314, 2
        %v316 = vadd.f32 %v314, %v315
        %v317 = vrot.slane %v316, 1
        %v318 = vadd.f32 %v316, %v317
        %v319 = vadd.f32 %v271, %v275
        %v320 = vrot.slane %v319, 4
        %v321 = vadd.f32 %v319, %v320
        %v322 = vrot.slane %v321, 2
        %v323 = vadd.f32 %v321, %v322
        %v324 = vrot.slane %v323, 1
        %v325 = vadd.f32 %v323, %v324
        %v326 = vadd.f32 %v277, %v281
        %v327 = vrot.slane %v326, 4
        %v328 = vadd.f32 %v326, %v327
        %v329 = vrot.slane %v328, 2
        %v330 = vadd.f32 %v328, %v329
        %v331 = vrot.slane %v330, 1
        %v332 = vadd.f32 %v330, %v331
        %v333 = vadd.f32 %v279, %v283
        %v334 = vrot.slane %v333, 4
        %v335 = vadd.f32 %v333, %v334
        %v336 = vrot.slane %v335, 2
        %v337 = vadd.f32 %v335, %v336
        %v338 = vrot.slane %v337, 1
        %v339 = vadd.f32 %v337, %v338
        %341 = vset.pattern.permute.xlu0 0
        %342 = vperm.xlu0 %341, %v178
        %v343 = vpop.permute.xlu0 %342
        %346 = vset.pattern.permute.xlu0 0
        %347 = vperm.xlu0 %346, %v179
        %v348 = vpop.permute.xlu0 %347
        %v350 = vmul.f32 %v253, %v343
        %v351 = vmul.f32 %v255, %v343
        %v352 = vmul.f32 %v257, %v348
        %v353 = vmul.f32 %v259, %v348
        %v354 = vmul.f32 %v261, %v343
        %v355 = vmul.f32 %v263, %v343
        %v356 = vmul.f32 %v265, %v348
        %v357 = vmul.f32 %v267, %v348
        %v358 = vmul.f32 %v269, %v343
        %v359 = vmul.f32 %v271, %v343
        %v360 = vmul.f32 %v273, %v348
        %v361 = vmul.f32 %v275, %v348
        %v362 = vmul.f32 %v277, %v343
        %v363 = vmul.f32 %v279, %v343
        %v364 = vmul.f32 %v281, %v348
        %v365 = vmul.f32 %v283, %v348
        %v366 = vadd.f32 %v350, %v352
        %v367 = vrot.slane %v366, 4
        %v368 = vadd.f32 %v366, %v367
        %v369 = vrot.slane %v368, 2
        %v370 = vadd.f32 %v368, %v369
        %v371 = vrot.slane %v370, 1
        %v372 = vadd.f32 %v370, %v371
        %v373 = vadd.f32 %v351, %v353
        %v374 = vrot.slane %v373, 4
        %v375 = vadd.f32 %v373, %v374
        %v376 = vrot.slane %v375, 2
        %v377 = vadd.f32 %v375, %v376
        %v378 = vrot.slane %v377, 1
        %v379 = vadd.f32 %v377, %v378
        %v380 = vadd.f32 %v354, %v356
        %v381 = vrot.slane %v380, 4
        %v382 = vadd.f32 %v380, %v381
        %v383 = vrot.slane %v382, 2
        %v384 = vadd.f32 %v382, %v383
        %v385 = vrot.slane %v384, 1
        %v386 = vadd.f32 %v384, %v385
        %v387 = vadd.f32 %v355, %v357
        %v388 = vrot.slane %v387, 4
        %v389 = vadd.f32 %v387, %v388
        %v390 = vrot.slane %v389, 2
        %v391 = vadd.f32 %v389, %v390
        %v392 = vrot.slane %v391, 1
        %v393 = vadd.f32 %v391, %v392
        %v394 = vadd.f32 %v358, %v360
        %v395 = vrot.slane %v394, 4
        %v396 = vadd.f32 %v394, %v395
        %v397 = vrot.slane %v396, 2
        %v398 = vadd.f32 %v396, %v397
        %v399 = vrot.slane %v398, 1
        %v400 = vadd.f32 %v398, %v399
        %v401 = vadd.f32 %v359, %v361
        %v402 = vrot.slane %v401, 4
        %v403 = vadd.f32 %v401, %v402
        %v404 = vrot.slane %v403, 2
        %v405 = vadd.f32 %v403, %v404
        %v406 = vrot.slane %v405, 1
        %v407 = vadd.f32 %v405, %v406
        %v408 = vadd.f32 %v362, %v364
        %v409 = vrot.slane %v408, 4
        %v410 = vadd.f32 %v408, %v409
        %v411 = vrot.slane %v410, 2
        %v412 = vadd.f32 %v410, %v411
        %v413 = vrot.slane %v412, 1
        %v414 = vadd.f32 %v412, %v413
        %v415 = vadd.f32 %v363, %v365
        %v416 = vrot.slane %v415, 4
        %v417 = vadd.f32 %v415, %v416
        %v418 = vrot.slane %v417, 2
        %v419 = vadd.f32 %v417, %v418
        %v420 = vrot.slane %v419, 1
        %v421 = vadd.f32 %v419, %v420
        %v422 = vrcp.pop %v290
        %v423 = vrcp.pop %v297
        %v424 = vrcp.pop %v304
        %v425 = vrcp.pop %v311
        %v426 = vrcp.pop %v318
        %v427 = vrcp.pop %v325
        %v428 = vrcp.pop %v332
        %v429 = vrcp.pop %v339
        %v430 = vmul.f32 %v290, %v422
        %v431 = vmul.f32 %v297, %v423
        %v432 = vmul.f32 %v304, %v424
        %v433 = vmul.f32 %v311, %v425
        %v434 = vmul.f32 %v318, %v426
        %v435 = vmul.f32 %v325, %v427
        %v436 = vmul.f32 %v332, %v428
        %v437 = vmul.f32 %v339, %v429
        %v438 = vsub.f32 2.0, %v430
        %v439 = vsub.f32 2.0, %v431
        %v440 = vsub.f32 2.0, %v432
        %v441 = vsub.f32 2.0, %v433
        %v442 = vsub.f32 2.0, %v434
        %v443 = vsub.f32 2.0, %v435
        %v444 = vsub.f32 2.0, %v436
        %v445 = vsub.f32 2.0, %v437
        %v446 = vmul.f32 %v422, %v438
        %v447 = vmul.f32 %v423, %v439
        %v448 = vmul.f32 %v424, %v440
        %v449 = vmul.f32 %v425, %v441
        %v450 = vmul.f32 %v426, %v442
        %v451 = vmul.f32 %v427, %v443
        %v452 = vmul.f32 %v428, %v444
        %v453 = vmul.f32 %v429, %v445
        %v454 = vmul.f32 %v372, %v446
        %v455 = vmul.f32 %v379, %v447
        %v456 = vmul.f32 %v386, %v448
        %v457 = vmul.f32 %v393, %v449
        %v458 = vmul.f32 %v400, %v450
        %v459 = vmul.f32 %v407, %v451
        %v460 = vmul.f32 %v414, %v452
        %v461 = vmul.f32 %v421, %v453
        %v470 = vcombine.low %v454, %v455
        %v471 = vcombine.low %v456, %v457
        %v472 = vcombine.low %v458, %v459
        %v473 = vcombine.low %v460, %v461
        %v474 = vrot.slane %v471, 7
        %vm475 = vcmask 1041409
        %v476 = vsel %vm475, %v474, %v470
        %vm477 = vcmask 1045509
        %v478 = vsel %vm477, %v474, %v476
        %v479 = vrot.slane %v472, 6
        %vm480 = vcmask 1042434
        %v481 = vsel %vm480, %v479, %v478
        %vm482 = vcmask 1046534
        %v483 = vsel %vm482, %v479, %v481
        %v484 = vrot.slane %v473, 5
        %vm485 = vcmask 1043459
        %v486 = vsel %vm485, %v484, %v483
        %vm487 = vcmask 1047559
        %v488 = vsel %vm487, %v484, %v486
        %490 = vst [vmem:[%s161] sm:$0xff] %v488
        %s491 = sand.u32 %s74, 1
        %s492 = scalar_lea.sflag [#allocation4], %s491
        %s493 = sand.u32 %s74, 1
        %s494 = smul.addr %s493, 8
        %s495 = scalar_lea.vmem [#allocation5], %s494
        // Predicated region
        $region33: #{tpu_custom_call.1} parent=27 // pred_check
          %p496 = pneg %p84
        $region34: #{tpu_custom_call.1} parent=27 // pred_check_branch
          %498 = sbr.rel (%p496) target = $region36
        $region35: #{tpu_custom_call.1} parent=27 // pred_region
          %s500 = ssub.s32 128, 128
          %501 = vsyncadd %s492, %s500
          %s502 = smul.addr %s19, 2
          %s503 = smul.addr %s502, 64
          %s504 = scalar_lea.hbm %s2, %s503
          %s506 = sshll.u32 %s495, 4
          %s507 = int_to_ptr.vmem [resolvable:$true] %s506
          %509 = dma.vmem_to_hbm [thread:$0]  %s507, 128, %s504, %s492
        $region36: #{tpu_custom_call.1} parent=27 // pred_fallthru
          _
      $region28: #{tpu_custom_call.1} parent=5 // pred_fallthru
        _
      %p510 = scmp.le.s32.totalorder 2, %s14
      // Predicated region
      $region37: #{tpu_custom_call.1} parent=5 // pred_check
        %p511 = pneg %p510
      $region38: #{tpu_custom_call.1} parent=5 // pred_check_branch
        %513 = sbr.rel (%p511) target = $region40
      $region39: #{tpu_custom_call.1} parent=5 // pred_region
        %s514 = ssub.s32 %s14, 2
        // Predicated region
        $region41: #{tpu_custom_call.1} parent=39 // pred_check
          %p515 = pneg %p90
        $region42: #{tpu_custom_call.1} parent=39 // pred_check_branch
          %517 = sbr.rel (%p515) target = $region44
        $region43: #{tpu_custom_call.1} parent=39 // pred_region
          %s518 = sand.u32 %s75, 1
          %s519 = scalar_lea.sflag [#allocation4], %s518
          %s520 = sand.u32 %s75, 1
          %s521 = smul.addr %s520, 8
          %s522 = scalar_lea.vmem [#allocation5], %s521
          %523 = dma.done %s519, 128
        $region44: #{tpu_custom_call.1} parent=39 // pred_fallthru
          _
      $region40: #{tpu_custom_call.1} parent=5 // pred_fallthru
        _
    $region6: #{tpu_custom_call.1} parent=1 // loop_footer
      %s18 = sadd.s32 1, %s14
    $region7: #{tpu_custom_call.1} parent=1 // loop_footer_branch
      %13 = sbr.rel target = $region3
    $region8: #{tpu_custom_call.1} parent=1 // loop_exit
      _
    %524 = vsyncpa [#allocation3], 1
    %s525 = scalar_lea.sflag [#allocation3], 1
    %526 = vsyncpa %s525, 1
    %527 = vsyncpa [#allocation4], 1
    %s528 = scalar_lea.sflag [#allocation4], 1
    %529 = vsyncpa %s528, 1

</llo_original>
